<compile_context>
chip_gen: v7x
topology: tpu7x:2x2x1
jax: 0.10.0
libtpu: 0.0.40
codegen_flags: <defaults>
</compile_context>

<pallas_src>
import jax
import jax.numpy as jnp
import numpy as np
from jax.experimental import pallas as pl
from jax.experimental.pallas import tpu as pltpu


def _round_up(x: int, m: int) -> int:
    return (x + m - 1) // m * m


# Transposed-RHS matmul dims: (M, K) . (N, K)^T -> (M, N)
_NT_DIMS = (((1,), (1,)), ((), ()))


# ---------------------------------------------------------------------------
# Parameter packing: one flat, 128-lane-wide VMEM operand, sliced with static
# (8-sublane-aligned) offsets inside the kernel.
# ---------------------------------------------------------------------------
def pack_value_net_params(hidden_params, w_out_row, b_out):
    """hidden_params: list of (W (in,out) f32, b (out,) f32) in forward order.
    w_out_row: (1, last_hidden) f32 head weight.  b_out: (1,) f32 head bias.
    Returns (packed (rows, width) f32 array, layout: name -> (row, nrows, ncols))."""
    width = 128
    for w, _ in hidden_params:
        width = max(width, _round_up(w.shape[1], 128))
    width = max(width, _round_up(w_out_row.shape[1], 128))

    layout = {}
    row = 0
    for i, (w, _) in enumerate(hidden_params):
        layout[f"w{i}"] = (row, w.shape[0], w.shape[1])
        row = _round_up(row + w.shape[0], 8)           # 8-sublane-aligned weight blocks
    for i, (_, b) in enumerate(hidden_params):
        layout[f"b{i}"] = (row, 1, b.shape[0])
        row = _round_up(row + 1, 8)                    # keep every slice 8-aligned
    layout["w_out"] = (row, 1, w_out_row.shape[1])
    row += 8                                           # reserve 8 rows (1..7 stay zero) -> M=8 head matmul
    layout["b_out"] = (row, 1, 1)
    total_rows = _round_up(row + 1, 8)

    buf = np.zeros((total_rows, width), dtype=np.float32)
    for i, (w, b) in enumerate(hidden_params):
        r, nr, nc = layout[f"w{i}"]
        buf[r:r + nr, :nc] = np.asarray(w, dtype=np.float32)
        rb, _, ncb = layout[f"b{i}"]
        buf[rb, :ncb] = np.asarray(b, dtype=np.float32)
    r, _, nc = layout["w_out"]
    buf[r, :nc] = np.asarray(w_out_row, dtype=np.float32).reshape(-1)
    r, _, _ = layout["b_out"]
    buf[r, 0] = float(np.asarray(b_out).reshape(()))
    return jnp.asarray(buf), layout


# ---------------------------------------------------------------------------
# Fused MLP kernel (all Linear+ReLU layers + value head in one body).
# ---------------------------------------------------------------------------
def make_valuenet_kernel(layout, num_hidden):
    def kernel(x_ref, p_ref, out_ref):
        h = x_ref[...].astype(jnp.float32)                  # (tile_b, state_dim)
        for i in range(num_hidden):
            ws, wr, wc = layout[f"w{i}"]
            bs, _, bc = layout[f"b{i}"]
            w = p_ref[ws:ws + wr, 0:wc]                      # static view into packed buf
            b = p_ref[bs:bs + 1, 0:bc]                       # (1, out) f32 bias row
            # bf16 MXU operands, f32 accumulation; bias add + ReLU stay in f32.
            h = jnp.dot(h.astype(jnp.bfloat16), w.astype(jnp.bfloat16),
                        preferred_element_type=jnp.float32) + b
            h = jnp.maximum(h, 0.0)                          # ReLU on the VPU
        # Value head, lane-dense: (8, K) . (tile_b, K)^T -> (8, tile_b); row 0 of
        # the weight block is the real head row, rows 1..7 are zeros from packing.
        wo_r, _, wo_c = layout["w_out"]
        bo_r, _, _ = layout["b_out"]
        w_out_blk = p_ref[wo_r:wo_r + 8, 0:wo_c]             # (8, K)
        b_out = p_ref[bo_r:bo_r + 1, 0:1]                    # (1, 1)
        v = jax.lax.dot_general(
            w_out_blk.astype(jnp.bfloat16), h.astype(jnp.bfloat16),
            dimension_numbers=_NT_DIMS,
            preferred_element_type=jnp.float32)              # (8, tile_b)
        out_ref[...] = v[0:1, :] + b_out                     # lane-dense (1, tile_b) store
    return kernel


# ---------------------------------------------------------------------------
# Wrapper: batch-tiled pallas_call, ragged last block, resident packed params.
# ---------------------------------------------------------------------------
def value_net_forward(x, packed, layout, *, tile_b_max=2048, use_core_parallel=False):
    """x: (B, state_dim) f32 (or bf16).  Returns (B, 1) f32 value estimates."""
    B, state_dim = x.shape
    num_hidden = sum(1 for k in layout if k.startswith("w") and k != "w_out")
    kernel = make_valuenet_kernel(layout, num_hidden)

    if B <= tile_b_max:
        tile_b = _round_up(B, 8)                 # single tile, no grid-step overhead
        num_tiles = 1
    else:
        tile_b = max(128, (tile_b_max // 128) * 128)   # lane-aligned multi-tile path
        num_tiles = pl.cdiv(B, tile_b)                  # ragged last block, no jnp.pad
    grid = (num_tiles,)
    out_cols = num_tiles * tile_b

    # Advisory cost estimate so XLA can schedule/overlap around this small call.
    rows = out_cols
    flops = 0
    for i in range(num_hidden):
        _, wr, wc = layout[f"w{i}"]
        flops += 2 * rows * wr * wc + rows * wc
    _, _, wo_c = layout["w_out"]
    flops += 2 * rows * wo_c
    bytes_accessed = x.size * x.dtype.itemsize + packed.size * 4 + out_cols * 4

    if use_core_parallel and num_tiles > 1:
        # v7x: explicitly split batch tiles across the 2 TensorCores (plain
        # "parallel" does not change codegen); skipped for single-tile batches.
        semantics = (pltpu.CORE_PARALLEL,)
    else:
        semantics = ("arbitrary",)

    out_row = pl.pallas_call(
        kernel,
        out_shape=jax.ShapeDtypeStruct((1, out_cols), jnp.float32),
        grid=grid,
        in_specs=[
            pl.BlockSpec((tile_b, state_dim), lambda i: (i, 0)),   # activation tile
            pl.BlockSpec(packed.shape, lambda i: (0, 0)),          # resident params (1 DMA)
        ],
        out_specs=pl.BlockSpec((1, tile_b), lambda i: (0, i)),     # lane-dense output row
        compiler_params=pltpu.CompilerParams(dimension_semantics=semantics),
        cost_estimate=pl.CostEstimate(
            flops=int(flops), transcendentals=0,
            bytes_accessed=int(bytes_accessed)),
    )(x, packed)
    return out_row[0, :B].reshape(B, 1)


# ---------------------------------------------------------------------------
# Init (mirrors _layer_init: orthogonal(weight, sqrt(2)), bias = const) & reference.
# ---------------------------------------------------------------------------
def init_value_net_params(key, state_dim, net_arch):
    gain = float(np.sqrt(2.0))
    ortho = jax.nn.initializers.orthogonal(scale=gain)
    hidden = []
    in_dim = state_dim
    for hdim in net_arch:
        key, sub = jax.random.split(key)
        w_pt = ortho(sub, (hdim, in_dim), jnp.float32)     # PyTorch layout (out, in)
        hidden.append((jnp.transpose(w_pt), jnp.zeros((hdim,), jnp.float32)))
        in_dim = hdim
    key, sub = jax.random.split(key)
    w_out_row = ortho(sub, (1, in_dim), jnp.float32)       # (1, in_dim)
    b_out = jnp.zeros((1,), jnp.float32)
    return hidden, w_out_row, b_out


def value_net_reference(x, hidden_params, w_out_row, b_out):
    """Pure-JAX reference with the same (bf16-operand, f32-accumulate) matmul
    precision the kernel (and TPU default-precision f32 matmuls) use."""
    bf16 = jnp.bfloat16
    h = x.astype(jnp.float32)
    for w, b in hidden_params:
        h = jnp.dot(h.astype(bf16), w.astype(bf16),
                    preferred_element_type=jnp.float32) + b[None, :]
        h = jnp.maximum(h, 0.0)
    v = jnp.dot(h.astype(bf16), jnp.transpose(w_out_row).astype(bf16),
                preferred_element_type=jnp.float32)
    return v + jnp.reshape(b_out, (1, 1))


if __name__ == "__main__":
    key = jax.random.PRNGKey(0)

    batch = 8
    state_dim = 32
    net_arch = [64, 64]

    key, xkey = jax.random.split(key)
    x = jax.random.normal(xkey, (batch, state_dim), dtype=jnp.float32)

    hidden_params, w_out_row, b_out = init_value_net_params(key, state_dim, net_arch)

    # The module inits biases to 0; perturb them so the self-test exercises the
    # bias path of the kernel (forward semantics are unchanged).
    perturbed = []
    for w, b in hidden_params:
        key, bkey = jax.random.split(key)
        perturbed.append((w, 0.1 * jax.random.normal(bkey, b.shape, jnp.float32)))
    hidden_params = perturbed
    key, bkey = jax.random.split(key)
    b_out = 0.1 * jax.random.normal(bkey, (1,), jnp.float32)

    packed, layout = pack_value_net_params(hidden_params, w_out_row, b_out)

    # Single-tile path (B=8).
    out = jax.block_until_ready(value_net_forward(x, packed, layout))
    ref = value_net_reference(x, hidden_params, w_out_row, b_out)
    assert out.shape == (batch, 1), out.shape
    np.testing.assert_allclose(np.asarray(out), np.asarray(ref), rtol=1e-5, atol=1e-5)

    # Multi-tile path with a ragged last block (no wrapper-side padding).
    key, xkey2 = jax.random.split(key)
    x2 = jax.random.normal(xkey2, (200, state_dim), dtype=jnp.float32)
    out2 = jax.block_until_ready(value_net_forward(x2, packed, layout, tile_b_max=128))
    ref2 = value_net_reference(x2, hidden_params, w_out_row, b_out)
    assert out2.shape == (200, 1), out2.shape
    np.testing.assert_allclose(np.asarray(out2), np.asarray(ref2), rtol=1e-5, atol=1e-5)

    print("KERNEL_OK")
</pallas_src>

<mosaic_0001>
module attributes {stable_mosaic.version = 11 : i64} {
  func.func @kernel(%arg0: i32, %arg1: memref<8x32xf32, #tpu.memory_space<vmem>>, %arg2: memref<128x128xf32, #tpu.memory_space<vmem>>, %arg3: memref<1x8xf32, #tpu.memory_space<vmem>>) attributes {dimension_semantics = [#tpu.dimension_semantics<arbitrary>], iteration_bounds = array<i64: 1>, scalar_prefetch = 0 : i64, scratch_operands = 0 : i64, tpu.core_type = #tpu.core_type<tc>, window_params = [{transform_indices = @transform_0, window_bounds = array<i64: 8, 32>}, {pipeline_mode = #tpu.pipeline_mode<synchronous>, transform_indices = @transform_1, window_bounds = array<i64: 128, 128>}, {transform_indices = @transform_2, window_bounds = array<i64: 1, 8>}]} {
    %c0 = arith.constant 0 : index
    %c0_0 = arith.constant 0 : index
    %0 = vector.load %arg1[%c0, %c0_0] : memref<8x32xf32, #tpu.memory_space<vmem>>, vector<8x32xf32>
    %c0_1 = arith.constant 0 : index
    %c0_2 = arith.constant 0 : index
    %1 = vector.load %arg2[%c0_1, %c0_2] : memref<128x128xf32, #tpu.memory_space<vmem>>, vector<32x64xf32>
    %c96 = arith.constant 96 : index
    %c0_3 = arith.constant 0 : index
    %2 = vector.load %arg2[%c96, %c0_3] : memref<128x128xf32, #tpu.memory_space<vmem>>, vector<1x64xf32>
    %3 = arith.truncf %0 : vector<8x32xf32> to vector<8x32xbf16>
    %4 = arith.truncf %1 : vector<32x64xf32> to vector<32x64xbf16>
    %cst = arith.constant dense<0.000000e+00> : vector<8x64xf32>
    %5 = tpu.matmul %3, %4, %cst {dimension_numbers = #tpu.dot_dimension_numbers<[1], [0], [0], [1], [0, 0, 1, 1], [], []>} : vector<8x32xbf16>, vector<32x64xbf16>, vector<8x64xf32> -> vector<8x64xf32>
    %6 = vector.broadcast %2 : vector<1x64xf32> to vector<8x64xf32>
    %7 = arith.addf %5, %6 : vector<8x64xf32>
    %cst_4 = arith.constant 0.000000e+00 : f32
    %8 = vector.broadcast %cst_4 : f32 to vector<8x64xf32>
    %9 = arith.maximumf %7, %8 : vector<8x64xf32>
    %c32 = arith.constant 32 : index
    %c0_5 = arith.constant 0 : index
    %10 = vector.load %arg2[%c32, %c0_5] : memref<128x128xf32, #tpu.memory_space<vmem>>, vector<64x64xf32>
    %c104 = arith.constant 104 : index
    %c0_6 = arith.constant 0 : index
    %11 = vector.load %arg2[%c104, %c0_6] : memref<128x128xf32, #tpu.memory_space<vmem>>, vector<1x64xf32>
    %12 = arith.truncf %9 : vector<8x64xf32> to vector<8x64xbf16>
    %13 = arith.truncf %10 : vector<64x64xf32> to vector<64x64xbf16>
    %cst_7 = arith.constant dense<0.000000e+00> : vector<8x64xf32>
    %14 = tpu.matmul %12, %13, %cst_7 {dimension_numbers = #tpu.dot_dimension_numbers<[1], [0], [0], [1], [0, 0, 1, 1], [], []>} : vector<8x64xbf16>, vector<64x64xbf16>, vector<8x64xf32> -> vector<8x64xf32>
    %15 = vector.broadcast %11 : vector<1x64xf32> to vector<8x64xf32>
    %16 = arith.addf %14, %15 : vector<8x64xf32>
    %cst_8 = arith.constant 0.000000e+00 : f32
    %17 = vector.broadcast %cst_8 : f32 to vector<8x64xf32>
    %18 = arith.maximumf %16, %17 : vector<8x64xf32>
    %c112 = arith.constant 112 : index
    %c0_9 = arith.constant 0 : index
    %19 = vector.load %arg2[%c112, %c0_9] : memref<128x128xf32, #tpu.memory_space<vmem>>, vector<8x64xf32>
    %c120 = arith.constant 120 : index
    %c0_10 = arith.constant 0 : index
    %20 = vector.load %arg2[%c120, %c0_10] : memref<128x128xf32, #tpu.memory_space<vmem>>, vector<1x1xf32>
    %21 = arith.truncf %19 : vector<8x64xf32> to vector<8x64xbf16>
    %22 = arith.truncf %18 : vector<8x64xf32> to vector<8x64xbf16>
    %cst_11 = arith.constant dense<0.000000e+00> : vector<8x8xf32>
    %23 = tpu.matmul %21, %22, %cst_11 {dimension_numbers = #tpu.dot_dimension_numbers<[1], [1], [0], [0], [0, 0, 1, 0], [], []>} : vector<8x64xbf16>, vector<8x64xbf16>, vector<8x8xf32> -> vector<8x8xf32>
    %24 = vector.extract_strided_slice %23 {offsets = [0, 0], sizes = [1, 8], strides = [1, 1]} : vector<8x8xf32> to vector<1x8xf32>
    %25 = vector.broadcast %20 : vector<1x1xf32> to vector<1x8xf32>
    %26 = arith.addf %24, %25 : vector<1x8xf32>
    %c0_12 = arith.constant 0 : index
    %c0_13 = arith.constant 0 : index
    %27 = vector.load %arg3[%c0_12, %c0_13] : memref<1x8xf32, #tpu.memory_space<vmem>>, vector<1x8xf32>
    tpu.vector_store %arg3[%c0_12, %c0_13], %26 {strides = array<i32>} : memref<1x8xf32, #tpu.memory_space<vmem>>, vector<1x8xf32>,
    return
  }
  func.func @transform_0(%arg0: i32) -> (i32, i32) {
    %c0_i32 = arith.constant 0 : i32
    %c0_i32_0 = arith.constant 0 : i32
    return %arg0, %c0_i32 : i32, i32
  }
  func.func @transform_1(%arg0: i32) -> (i32, i32) {
    %c0_i32 = arith.constant 0 : i32
    %c0_i32_0 = arith.constant 0 : i32
    %c0_i32_1 = arith.constant 0 : i32
    return %c0_i32, %c0_i32_0 : i32, i32
  }
  func.func @transform_2(%arg0: i32) -> (i32, i32) {
    %c0_i32 = arith.constant 0 : i32
    %c0_i32_0 = arith.constant 0 : i32
    return %c0_i32, %arg0 : i32, i32
  }
}

</mosaic_0001>

<llo_original>
// kernel: tpu_custom_call.1
$region0: #{tpu_custom_call.1}
  #allocation0 [shape = 'u32[]', space=smem, size = 0x4, offset = 0x4, fixed_abs, tag = 'smem constant byte address 0x4 - core index']
  #allocation1 [shape = 'u32[144,128]{1,0:T(1,128)}', space=vmem, size = 0x12000, scoped, tag = 'internal scratch']
  %s0 = inlined_call_operand.hbm [shape: f32[8,32], index: 0, kind: input, shape index: {}]
  %s1 = inlined_call_operand.hbm [shape: f32[128,128], index: 1, kind: input, shape index: {}]
  %s2 = inlined_call_operand.hbm [shape: f32[1,8], index: 2, kind: output, shape index: {}]
  %s3 = sld [smem:[#allocation0]]
  $region26: #{tpu_custom_call.1} parent=0
    _
  %s5 = ssub.s32 1, %s3
  %s6 = scalar_select 0, %s5, %s3
  $region1: #{tpu_custom_call.1} parent=0
    #allocation2 [shape = 'u8[4096]{0}', space=vmem, size = 0x1000, scoped, tag = 'input window, operand 0, single buffered']
    #allocation3 [shape = 's32[1]{0}', space=sflag, size = 0x4, scoped, tag = 'scoped memory for tpu_custom_call.1']
    #allocation4 [shape = 's32[1]{0}', space=sflag, size = 0x4, scoped, tag = 'scoped memory for tpu_custom_call.1']
    #allocation5 [shape = 'u8[65536]{0}', space=vmem, size = 0x10000, scoped, tag = 'input window, operand 1, single buffered']
    #allocation6 [shape = 's32[1]{0}', space=sflag, size = 0x4, scoped, tag = 'scoped memory for tpu_custom_call.1']
    #allocation7 [shape = 'u8[512]{0}', space=vmem, size = 0x400, scoped, tag = 'output window, operand 0, single buffered']
    %7 = vsyncpa [#allocation3], 0
    %8 = vsyncpa [#allocation6], 0
    %9 = vsyncpa [#allocation4], 0
    // Predicated region
    $region2: #{tpu_custom_call.1} parent=1 // pred_check
      _
    $region3: #{tpu_custom_call.1} parent=1 // pred_check_branch
      %11 = sbr.rel (0) target = $region5
    $region4: #{tpu_custom_call.1} parent=1 // pred_region
      %s13 = ssub.s32 128, 128
      %14 = vsyncadd [#allocation3], %s13
      %s16 = sshll.u32 [#allocation2], 4
      %s17 = int_to_ptr.vmem [resolvable:$true] %s16
      %19 = dma.hbm_to_vmem [thread:$0]  %s0, 128, %s17, [#allocation3]
    $region5: #{tpu_custom_call.1} parent=1 // pred_fallthru
      _
    // Predicated region
    $region6: #{tpu_custom_call.1} parent=1 // pred_check
      _
    $region7: #{tpu_custom_call.1} parent=1 // pred_check_branch
      %21 = sbr.rel (0) target = $region9
    $region8: #{tpu_custom_call.1} parent=1 // pred_region
      %s23 = ssub.s32 2048, 2048
      %24 = vsyncadd [#allocation6], %s23
      %s25 = sshll.u32 [#allocation5], 4
      %s26 = int_to_ptr.vmem [resolvable:$true] %s25
      %31 = dma.hbm_to_vmem [thread:$0]  %s1, 2048, %s26, [#allocation6], 128, 128, 8
    $region9: #{tpu_custom_call.1} parent=1 // pred_fallthru
      _
    // Predicated region
    $region10: #{tpu_custom_call.1} parent=1 // pred_check
      _
    $region11: #{tpu_custom_call.1} parent=1 // pred_check_branch
      %33 = sbr.rel (0) target = $region13
    $region12: #{tpu_custom_call.1} parent=1 // pred_region
      %34 = dma.done [#allocation3], 128
    $region13: #{tpu_custom_call.1} parent=1 // pred_fallthru
      _
    // Predicated region
    $region14: #{tpu_custom_call.1} parent=1 // pred_check
      _
    $region15: #{tpu_custom_call.1} parent=1 // pred_check_branch
      %36 = sbr.rel (0) target = $region17
    $region16: #{tpu_custom_call.1} parent=1 // pred_region
      %37 = dma.done [#allocation6], 2048
    $region17: #{tpu_custom_call.1} parent=1 // pred_fallthru
      _
    %v39 = vld [vmem:[#allocation2] sm:$0xff]
    %v40 = vld [vmem:[#allocation5] sm:$0xff]
    %v41 = vld [vmem:[#allocation5 + $0x8] sm:$0xff]
    %v42 = vld [vmem:[#allocation5 + $0x10] sm:$0xff]
    %v43 = vld [vmem:[#allocation5 + $0x18] sm:$0xff]
    %v44 = vld [vmem:[#allocation5 + $0x60] sm:$0x1]
    %v45 = vpack.c.bf16 %v39, %v39
    %v46 = vpack.c.bf16 %v41, %v40
    %v47 = vpack.c.bf16 %v43, %v42
    %v48 = vlaneseq
    %v49 = vshrl.u32 %v48, 7
    %v50 = vsub.s32 0, %v49
    %v51 = vrot.slane %v44, %v50
    %vm52 = vcmask 261120
    %v54 = vsel %vm52, %v45, 0
    %56 = vmatprep.subr.bf16.mxu0 0
    %57 = vmatpush1.bf16.msra.mxu0 %v46
    %58 = vmatprep.subr.bf16.mxu0 0
    %59 = vmatpush1.bf16.msra.mxu0 %v47
    %60 = vmatprep.subr.bf16.mxu0 0
    %61 = vmatpush1.bf16.msra.mxu0 0
    %62 = vmatprep.subr.bf16.mxu0 0
    %63 = vmatpush1.bf16.msra.mxu0 0
    %64 = vmatprep.subr.bf16.mxu0 0
    %65 = vmatpush1.bf16.msra.mxu0 0
    %66 = vmatprep.subr.bf16.mxu0 0
    %67 = vmatpush1.bf16.msra.mxu0 0
    %68 = vmatprep.subr.bf16.mxu0 0
    %69 = vmatpush1.bf16.msra.mxu0 0
    %70 = vmatprep.subr.bf16.mxu0 0
    %71 = vmatpush1.bf16.msra.mxu0 0
    %72 = vmatprep.subr.bf16.mxu0 0
    %73 = vmatpush1.bf16.msra.mxu0 0
    %74 = vmatprep.subr.bf16.mxu0 0
    %75 = vmatpush1.bf16.msra.mxu0 0
    %76 = vmatprep.subr.bf16.mxu0 0
    %77 = vmatpush1.bf16.msra.mxu0 0
    %78 = vmatprep.subr.bf16.mxu0 0
    %79 = vmatpush1.bf16.msra.mxu0 0
    %80 = vmatprep.subr.bf16.mxu0 0
    %81 = vmatpush1.bf16.msra.mxu0 0
    %82 = vmatprep.subr.bf16.mxu0 0
    %83 = vmatpush1.bf16.msra.mxu0 0
    %84 = vmatprep.subr.bf16.mxu0 0
    %85 = vmatpush1.bf16.msra.mxu0 0
    %86 = vmatprep.subr.bf16.mxu0 0
    %87 = vmatpush1.bf16.msra.mxu0 0
    %88 = vmatprep.mubr.bf16.mxu0 0
    %89 = vmatmul.mubr.bf16.gmra.mrb[0].mxu0 %v54
    %v90 = vpop.f32.mrb[0].mxu0
    %v91 = vadd.f32 %v51, %v90
    %v92 = vpop.f32.mrb[0].mxu0
    %v93 = vpop.f32.mrb[0].mxu0
    %v94 = vpop.f32.mrb[0].mxu0
    %95 = vdwg.mxu0
    %v96 = vmax.f32 %v91, 0.0
    %v97 = vld [vmem:[#allocation5 + $0x20] sm:$0xff]
    %v98 = vld [vmem:[#allocation5 + $0x28] sm:$0xff]
    %v99 = vld [vmem:[#allocation5 + $0x30] sm:$0xff]
    %v100 = vld [vmem:[#allocation5 + $0x38] sm:$0xff]
    %v101 = vld [vmem:[#allocation5 + $0x40] sm:$0xff]
    %v102 = vld [vmem:[#allocation5 + $0x48] sm:$0xff]
    %v103 = vld [vmem:[#allocation5 + $0x50] sm:$0xff]
    %v104 = vld [vmem:[#allocation5 + $0x58] sm:$0xff]
    %v105 = vld [vmem:[#allocation5 + $0x68] sm:$0x1]
    %v106 = vpack.c.bf16 %v96, %v96
    %v107 = vpack.c.bf16 %v98, %v97
    %v108 = vpack.c.bf16 %v100, %v99
    %v109 = vpack.c.bf16 %v102, %v101
    %v110 = vpack.c.bf16 %v104, %v103
    %v111 = vlaneseq
    %v112 = vshrl.u32 %v111, 7
    %v113 = vsub.s32 0, %v112
    %v114 = vrot.slane %v105, %v113
    %vm115 = vcmask 523264
    %v117 = vsel %vm115, %v106, 0
    %119 = vmatprep.subr.bf16.mxu0 0
    %120 = vmatpush1.bf16.msra.mxu0 %v107
    %121 = vmatprep.subr.bf16.mxu0 0
    %122 = vmatpush1.bf16.msra.mxu0 %v108
    %123 = vmatprep.subr.bf16.mxu0 0
    %124 = vmatpush1.bf16.msra.mxu0 %v109
    %125 = vmatprep.subr.bf16.mxu0 0
    %126 = vmatpush1.bf16.msra.mxu0 %v110
    %127 = vmatprep.subr.bf16.mxu0 0
    %128 = vmatpush1.bf16.msra.mxu0 0
    %129 = vmatprep.subr.bf16.mxu0 0
    %130 = vmatpush1.bf16.msra.mxu0 0
    %131 = vmatprep.subr.bf16.mxu0 0
    %132 = vmatpush1.bf16.msra.mxu0 0
    %133 = vmatprep.subr.bf16.mxu0 0
    %134 = vmatpush1.bf16.msra.mxu0 0
    %135 = vmatprep.subr.bf16.mxu0 0
    %136 = vmatpush1.bf16.msra.mxu0 0
    %137 = vmatprep.subr.bf16.mxu0 0
    %138 = vmatpush1.bf16.msra.mxu0 0
    %139 = vmatprep.subr.bf16.mxu0 0
    %140 = vmatpush1.bf16.msra.mxu0 0
    %141 = vmatprep.subr.bf16.mxu0 0
    %142 = vmatpush1.bf16.msra.mxu0 0
    %143 = vmatprep.subr.bf16.mxu0 0
    %144 = vmatpush1.bf16.msra.mxu0 0
    %145 = vmatprep.subr.bf16.mxu0 0
    %146 = vmatpush1.bf16.msra.mxu0 0
    %147 = vmatprep.subr.bf16.mxu0 0
    %148 = vmatpush1.bf16.msra.mxu0 0
    %149 = vmatprep.subr.bf16.mxu0 0
    %150 = vmatpush1.bf16.msra.mxu0 0
    %151 = vmatprep.mubr.bf16.mxu0 0
    %152 = vmatmul.mubr.bf16.gmra.mrb[0].mxu0 %v117
    %v153 = vpop.f32.mrb[0].mxu0
    %v154 = vadd.f32 %v114, %v153
    %v155 = vpop.f32.mrb[0].mxu0
    %v156 = vpop.f32.mrb[0].mxu0
    %v157 = vpop.f32.mrb[0].mxu0
    %158 = vdwg.mxu0
    %v159 = vmax.f32 %v154, 0.0
    %v160 = vld [vmem:[#allocation5 + $0x70] sm:$0xff]
    %v161 = vld [vmem:[#allocation5 + $0x78] sm:$0x1]
    %v162 = vpack.c.bf16 %v160, %v160
    %v163 = vpack.c.bf16 %v159, %v159
    %v165 = vsel %vm115, %v162, 0
    %v168 = vsel %vm115, %v163, 0
    %170 = vmatprep.subr.bf16.mxu0 0
    %171 = vmatpush1.bf16.xpose.msra.mxu0 %v168
    %172 = vmatprep.subr.bf16.mxu0 0
    %173 = vmatpush1.bf16.xpose.msra.mxu0 0
    %174 = vmatprep.subr.bf16.mxu0 0
    %175 = vmatpush1.bf16.xpose.msra.mxu0 0
    %176 = vmatprep.subr.bf16.mxu0 0
    %177 = vmatpush1.bf16.xpose.msra.mxu0 0
    %178 = vmatprep.subr.bf16.mxu0 0
    %179 = vmatpush1.bf16.xpose.msra.mxu0 0
    %180 = vmatprep.subr.bf16.mxu0 0
    %181 = vmatpush1.bf16.xpose.msra.mxu0 0
    %182 = vmatprep.subr.bf16.mxu0 0
    %183 = vmatpush1.bf16.xpose.msra.mxu0 0
    %184 = vmatprep.subr.bf16.mxu0 0
    %185 = vmatpush1.bf16.xpose.msra.mxu0 0
    %186 = vmatprep.subr.bf16.mxu0 0
    %187 = vmatpush1.bf16.xpose.msra.mxu0 0
    %188 = vmatprep.subr.bf16.mxu0 0
    %189 = vmatpush1.bf16.xpose.msra.mxu0 0
    %190 = vmatprep.subr.bf16.mxu0 0
    %191 = vmatpush1.bf16.xpose.msra.mxu0 0
    %192 = vmatprep.subr.bf16.mxu0 0
    %193 = vmatpush1.bf16.xpose.msra.mxu0 0
    %194 = vmatprep.subr.bf16.mxu0 0
    %195 = vmatpush1.bf16.xpose.msra.mxu0 0
    %196 = vmatprep.subr.bf16.mxu0 0
    %197 = vmatpush1.bf16.xpose.msra.mxu0 0
    %198 = vmatprep.subr.bf16.mxu0 0
    %199 = vmatpush1.bf16.xpose.msra.mxu0 0
    %200 = vmatprep.subr.bf16.mxu0 0
    %201 = vmatpush1.bf16.xpose.msra.mxu0 0
    %202 = vmatprep.mubr.bf16.mxu0 0
    %203 = vmatmul.mubr.bf16.gmra.mrb[0].mxu0 %v165
    %v204 = vpop.f32.mrb[0].mxu0
    %v205 = vadd.f32 0.0, %v204
    %v206 = vpop.f32.mrb[0].mxu0
    %v207 = vpop.f32.mrb[0].mxu0
    %v208 = vpop.f32.mrb[0].mxu0
    %209 = vdwg.mxu0
    %211 = vset.pattern.permute.xlu0 0
    %212 = vperm.xlu0 %211, %v161
    %v213 = vpop.permute.xlu0 %212
    %v215 = vadd.f32 %v205, %v213
    %vm216 = vcmask 57344
    %217 = vst.msk [vmem:[#allocation7] sm:$0x1] %vm216, %v215
    // Predicated region
    $region18: #{tpu_custom_call.1} parent=1 // pred_check
      _
    $region19: #{tpu_custom_call.1} parent=1 // pred_check_branch
      %219 = sbr.rel (0) target = $region21
    $region20: #{tpu_custom_call.1} parent=1 // pred_region
      %s221 = ssub.s32 16, 16
      %222 = vsyncadd [#allocation4], %s221
      %s224 = sshll.u32 [#allocation7], 4
      %s225 = int_to_ptr.vmem [resolvable:$true] %s224
      %227 = dma.vmem_to_hbm [thread:$0]  %s225, 16, %s2, [#allocation4]
    $region21: #{tpu_custom_call.1} parent=1 // pred_fallthru
      _
    // Predicated region
    $region22: #{tpu_custom_call.1} parent=1 // pred_check
      _
    $region23: #{tpu_custom_call.1} parent=1 // pred_check_branch
      %229 = sbr.rel (0) target = $region25
    $region24: #{tpu_custom_call.1} parent=1 // pred_region
      %230 = dma.done [#allocation4], 16
    $region25: #{tpu_custom_call.1} parent=1 // pred_fallthru
      _
    %231 = vsyncpa [#allocation3], 1
    %232 = vsyncpa [#allocation6], 1
    %233 = vsyncpa [#allocation4], 1

</llo_original>
